<compile_context>
chip_gen: v7x
topology: tpu7x:2x2x1
jax: 0.10.0
libtpu: 0.0.40
codegen_flags: <defaults>
</compile_context>

<pallas_src>
import functools

import jax
import jax.numpy as jnp
from jax.experimental import pallas as pl
from jax.experimental.pallas import tpu as pltpu

_LANES = 128


def _combined_loss_kernel(w_mse, w_l1, inv_n,
                          pred_ref, targ_ref, out_ref, acc_sq, acc_ab):
    """grid = (slice, tile): inner axis streams row tiles; VMEM vector accumulators."""
    i = pl.program_id(1)

    @pl.when(i == 0)
    def _():
        acc_sq[...] = jnp.zeros_like(acc_sq)
        acc_ab[...] = jnp.zeros_like(acc_ab)

    d = pred_ref[...].astype(jnp.float32) - targ_ref[...].astype(jnp.float32)
    # (tile_rows, 128) -> (tile_rows//8, 8, 128) is a tile-aligned (view) reshape;
    # summing over the major axis is pure elementwise VPU work hidden under DMA.
    acc_sq[...] += jnp.sum((d * d).reshape(-1, 8, _LANES), axis=0)
    acc_ab[...] += jnp.sum(jnp.abs(d).reshape(-1, 8, _LANES), axis=0)

    @pl.when(i == pl.num_programs(1) - 1)
    def _():
        # Weighted per-lane partial sums for this slice; the tiny final reduce
        # over (n_slices*8, 128) happens in the JAX wrapper.
        out_ref[...] = (w_mse * acc_sq[...] + w_l1 * acc_ab[...]) * inv_n


def _round_up(x, m):
    return ((x + m - 1) // m) * m


def combined_loss(pred, target, weights=(0.7, 0.3), tile_rows=2048, n_slices=2):
    """CombinedLoss forward: weights[0]*MSE(pred,target) + weights[1]*L1(pred,target)."""
    assert pred.shape == target.shape
    n = pred.size
    w_mse, w_l1 = float(weights[0]), float(weights[1])

    # Common dtype; keep sub-32-bit inputs native (kernel upcasts per tile).
    cdt = jnp.promote_types(pred.dtype, target.dtype)
    if not jnp.issubdtype(cdt, jnp.floating):
        cdt = jnp.float32
    if pred.dtype != cdt:
        pred = pred.astype(cdt)
    if target.dtype != cdt:
        target = target.astype(cdt)

    # Sublane multiple for this dtype's (8,128)-style packed tiling.
    pack = max(1, 4 // jnp.dtype(cdt).itemsize)
    sub_mult = 8 * pack

    rows = -(-n // _LANES)
    eff_tile = min(_round_up(tile_rows, sub_mult),
                   _round_up(max(1, -(-rows // n_slices)), sub_mult))
    tiles_per_slice = max(1, -(-rows // (n_slices * eff_tile)))
    rows_padded = n_slices * tiles_per_slice * eff_tile
    n_padded = rows_padded * _LANES

    flat_p = pred.reshape(-1)
    flat_t = target.reshape(-1)
    if n_padded != n:
        flat_p = jnp.pad(flat_p, (0, n_padded - n))
        flat_t = jnp.pad(flat_t, (0, n_padded - n))
    pred2 = flat_p.reshape(rows_padded, _LANES)
    targ2 = flat_t.reshape(rows_padded, _LANES)

    kernel = functools.partial(_combined_loss_kernel, w_mse, w_l1, 1.0 / float(n))
    in_map = lambda c, i: (c * tiles_per_slice + i, 0)

    partials = pl.pallas_call(
        kernel,
        out_shape=jax.ShapeDtypeStruct((n_slices * 8, _LANES), jnp.float32),
        grid_spec=pltpu.PrefetchScalarGridSpec(
            num_scalar_prefetch=0,
            grid=(n_slices, tiles_per_slice),
            in_specs=[
                pl.BlockSpec((eff_tile, _LANES), in_map),
                pl.BlockSpec((eff_tile, _LANES), in_map),
            ],
            out_specs=pl.BlockSpec((8, _LANES), lambda c, i: (c, 0)),
            scratch_shapes=[pltpu.VMEM((8, _LANES), jnp.float32),
                            pltpu.VMEM((8, _LANES), jnp.float32)],
        ),
        compiler_params=pltpu.CompilerParams(
            dimension_semantics=("parallel", "arbitrary")),
    )(pred2, targ2)

    return jnp.sum(partials)


def _reference(pred, target, weights=(0.7, 0.3)):
    d = pred.astype(jnp.float32) - target.astype(jnp.float32)
    return weights[0] * jnp.mean(d * d) + weights[1] * jnp.mean(jnp.abs(d))


if __name__ == "__main__":
    key = jax.random.PRNGKey(0)
    k1, k2, k3, k4 = jax.random.split(key, 4)

    # Small NCHW prediction/target pair.
    pred = jax.random.normal(k1, (2, 4, 16, 16), dtype=jnp.float32)
    target = jax.random.normal(k2, (2, 4, 16, 16), dtype=jnp.float32)
    loss = jax.block_until_ready(combined_loss(pred, target, weights=(0.7, 0.3)))
    ref = _reference(pred, target)
    assert jnp.allclose(loss, ref, rtol=1e-5, atol=1e-6), (loss, ref)

    # Ragged shape (size not a multiple of 128) exercises the zero-pad path.
    pred_r = jax.random.normal(k3, (3, 5, 7, 11), dtype=jnp.float32)
    targ_r = jax.random.normal(k4, (3, 5, 7, 11), dtype=jnp.float32)
    loss_r = jax.block_until_ready(combined_loss(pred_r, targ_r, weights=(0.7, 0.3)))
    ref_r = _reference(pred_r, targ_r)
    assert jnp.allclose(loss_r, ref_r, rtol=1e-5, atol=1e-6), (loss_r, ref_r)

    # bf16 inputs stream at native width (no wrapper upcast), kernel math in f32.
    pred_b = pred.astype(jnp.bfloat16)
    targ_b = target.astype(jnp.bfloat16)
    loss_b = jax.block_until_ready(combined_loss(pred_b, targ_b, weights=(0.7, 0.3)))
    ref_b = _reference(pred_b, targ_b)
    assert jnp.allclose(loss_b, ref_b, rtol=1e-2, atol=1e-3), (loss_b, ref_b)

    print("KERNEL_OK")
</pallas_src>

<mosaic_0001>
module attributes {stable_mosaic.version = 11 : i64} {
  func.func @_combined_loss_kernel(%arg0: i32, %arg1: i32, %arg2: memref<8x128xf32, #tpu.memory_space<vmem>>, %arg3: memref<8x128xf32, #tpu.memory_space<vmem>>, %arg4: memref<8x128xf32, #tpu.memory_space<vmem>>, %arg5: memref<8x128xf32, #tpu.memory_space<vmem>>, %arg6: memref<8x128xf32, #tpu.memory_space<vmem>>) attributes {dimension_semantics = [#tpu.dimension_semantics<parallel>, #tpu.dimension_semantics<arbitrary>], iteration_bounds = array<i64: 2, 1>, scalar_prefetch = 0 : i64, scratch_operands = 2 : i64, tpu.core_type = #tpu.core_type<tc>, window_params = [{transform_indices = @transform_0, window_bounds = array<i64: 8, 128>}, {transform_indices = @transform_1, window_bounds = array<i64: 8, 128>}, {transform_indices = @transform_2, window_bounds = array<i64: 8, 128>}]} {
    %c0_i32 = arith.constant 0 : i32
    %0 = arith.cmpi eq, %arg1, %c0_i32 : i32
    %1 = arith.extui %0 : i1 to i32
    %c0_i32_0 = arith.constant 0 : i32
    %2 = arith.cmpi ne, %1, %c0_i32_0 : i32
    scf.if %2 {
      %cst_15 = arith.constant 0.000000e+00 : f32
      %21 = vector.broadcast %cst_15 : f32 to vector<8x128xf32>
      %c0_16 = arith.constant 0 : index
      %c0_17 = arith.constant 0 : index
      %22 = vector.load %arg5[%c0_16, %c0_17] : memref<8x128xf32, #tpu.memory_space<vmem>>, vector<8x128xf32>
      tpu.vector_store %arg5[%c0_16, %c0_17], %21 {strides = array<i32>} : memref<8x128xf32, #tpu.memory_space<vmem>>, vector<8x128xf32>,
      %cst_18 = arith.constant 0.000000e+00 : f32
      %23 = vector.broadcast %cst_18 : f32 to vector<8x128xf32>
      %c0_19 = arith.constant 0 : index
      %c0_20 = arith.constant 0 : index
      %24 = vector.load %arg6[%c0_19, %c0_20] : memref<8x128xf32, #tpu.memory_space<vmem>>, vector<8x128xf32>
      tpu.vector_store %arg6[%c0_19, %c0_20], %23 {strides = array<i32>} : memref<8x128xf32, #tpu.memory_space<vmem>>, vector<8x128xf32>,
    } else {
    }
    %c0 = arith.constant 0 : index
    %c0_1 = arith.constant 0 : index
    %3 = vector.load %arg2[%c0, %c0_1] : memref<8x128xf32, #tpu.memory_space<vmem>>, vector<8x128xf32>
    %c0_2 = arith.constant 0 : index
    %c0_3 = arith.constant 0 : index
    %4 = vector.load %arg3[%c0_2, %c0_3] : memref<8x128xf32, #tpu.memory_space<vmem>>, vector<8x128xf32>
    %5 = arith.subf %3, %4 : vector<8x128xf32>
    %c0_4 = arith.constant 0 : index
    %c0_5 = arith.constant 0 : index
    %6 = vector.load %arg5[%c0_4, %c0_5] : memref<8x128xf32, #tpu.memory_space<vmem>>, vector<8x128xf32>
    %7 = arith.mulf %5, %5 : vector<8x128xf32>
    %8 = vector.shape_cast %7 : vector<8x128xf32> to vector<1x8x128xf32>
    %cst = arith.constant dense<0.000000e+00> : vector<8x128xf32>
    %9 = vector.multi_reduction <add>, %8, %cst [0] : vector<1x8x128xf32> to vector<8x128xf32>
    %10 = arith.addf %6, %9 : vector<8x128xf32>
    %c0_6 = arith.constant 0 : index
    %c0_7 = arith.constant 0 : index
    %11 = vector.load %arg5[%c0_6, %c0_7] : memref<8x128xf32, #tpu.memory_space<vmem>>, vector<8x128xf32>
    tpu.vector_store %arg5[%c0_6, %c0_7], %10 {strides = array<i32>} : memref<8x128xf32, #tpu.memory_space<vmem>>, vector<8x128xf32>,
    %c0_8 = arith.constant 0 : index
    %c0_9 = arith.constant 0 : index
    %12 = vector.load %arg6[%c0_8, %c0_9] : memref<8x128xf32, #tpu.memory_space<vmem>>, vector<8x128xf32>
    %13 = math.absf %5 : vector<8x128xf32>
    %14 = vector.shape_cast %13 : vector<8x128xf32> to vector<1x8x128xf32>
    %cst_10 = arith.constant dense<0.000000e+00> : vector<8x128xf32>
    %15 = vector.multi_reduction <add>, %14, %cst_10 [0] : vector<1x8x128xf32> to vector<8x128xf32>
    %16 = arith.addf %12, %15 : vector<8x128xf32>
    %c0_11 = arith.constant 0 : index
    %c0_12 = arith.constant 0 : index
    %17 = vector.load %arg6[%c0_11, %c0_12] : memref<8x128xf32, #tpu.memory_space<vmem>>, vector<8x128xf32>
    tpu.vector_store %arg6[%c0_11, %c0_12], %16 {strides = array<i32>} : memref<8x128xf32, #tpu.memory_space<vmem>>, vector<8x128xf32>,
    %c0_i32_13 = arith.constant 0 : i32
    %18 = arith.cmpi eq, %arg1, %c0_i32_13 : i32
    %19 = arith.extui %18 : i1 to i32
    %c0_i32_14 = arith.constant 0 : i32
    %20 = arith.cmpi ne, %19, %c0_i32_14 : i32
    scf.if %20 {
      %c0_15 = arith.constant 0 : index
      %c0_16 = arith.constant 0 : index
      %21 = vector.load %arg5[%c0_15, %c0_16] : memref<8x128xf32, #tpu.memory_space<vmem>>, vector<8x128xf32>
      %cst_17 = arith.constant 0.699999988 : f32
      %22 = vector.broadcast %cst_17 : f32 to vector<8x128xf32>
      %23 = arith.mulf %22, %21 : vector<8x128xf32>
      %c0_18 = arith.constant 0 : index
      %c0_19 = arith.constant 0 : index
      %24 = vector.load %arg6[%c0_18, %c0_19] : memref<8x128xf32, #tpu.memory_space<vmem>>, vector<8x128xf32>
      %cst_20 = arith.constant 3.000000e-01 : f32
      %25 = vector.broadcast %cst_20 : f32 to vector<8x128xf32>
      %26 = arith.mulf %25, %24 : vector<8x128xf32>
      %27 = arith.addf %23, %26 : vector<8x128xf32>
      %cst_21 = arith.constant 4.8828125E-4 : f32
      %28 = vector.broadcast %cst_21 : f32 to vector<8x128xf32>
      %29 = arith.mulf %27, %28 : vector<8x128xf32>
      %c0_22 = arith.constant 0 : index
      %c0_23 = arith.constant 0 : index
      %30 = vector.load %arg4[%c0_22, %c0_23] : memref<8x128xf32, #tpu.memory_space<vmem>>, vector<8x128xf32>
      tpu.vector_store %arg4[%c0_22, %c0_23], %29 {strides = array<i32>} : memref<8x128xf32, #tpu.memory_space<vmem>>, vector<8x128xf32>,
    } else {
    }
    return
  }
  func.func @transform_0(%arg0: i32, %arg1: i32) -> (i32, i32) {
    %c1_i32 = arith.constant 1 : i32
    %0 = arith.muli %arg0, %c1_i32 : i32
    %1 = arith.addi %0, %arg1 : i32
    %c0_i32 = arith.constant 0 : i32
    %c0_i32_0 = arith.constant 0 : i32
    return %1, %c0_i32 : i32, i32
  }
  func.func @transform_1(%arg0: i32, %arg1: i32) -> (i32, i32) {
    %c1_i32 = arith.constant 1 : i32
    %0 = arith.muli %arg0, %c1_i32 : i32
    %1 = arith.addi %0, %arg1 : i32
    %c0_i32 = arith.constant 0 : i32
    %c0_i32_0 = arith.constant 0 : i32
    return %1, %c0_i32 : i32, i32
  }
  func.func @transform_2(%arg0: i32, %arg1: i32) -> (i32, i32) {
    %c0_i32 = arith.constant 0 : i32
    %c0_i32_0 = arith.constant 0 : i32
    return %arg0, %c0_i32 : i32, i32
  }
}

</mosaic_0001>

<llo_original>
// kernel: tpu_custom_call.1
$region0: #{tpu_custom_call.1}
  #allocation0 [shape = 'u32[]', space=smem, size = 0x4, offset = 0x4, fixed_abs, tag = 'smem constant byte address 0x4 - core index']
  #allocation1 [shape = 'u32[144,128]{1,0:T(1,128)}', space=vmem, size = 0x12000, scoped, tag = 'internal scratch']
  #allocation2 [shape = 'f32[8,128]{1,0:T(8,128)}', space=vmem, size = 0x1000, scoped, tag = 'scratch operand']
  #allocation3 [shape = 'f32[8,128]{1,0:T(8,128)}', space=vmem, size = 0x1000, scoped, tag = 'scratch operand']
  %s0 = inlined_call_operand.hbm [shape: f32[16,128], index: 0, kind: input, shape index: {}]
  %s1 = inlined_call_operand.hbm [shape: f32[16,128], index: 1, kind: input, shape index: {}]
  %s2 = inlined_call_operand.hbm [shape: f32[16,128], index: 2, kind: output, shape index: {}]
  %s3 = sld [smem:[#allocation0]]
  $region57: #{tpu_custom_call.1} parent=0
    _
  %s5 = ssub.s32 1, %s3
  %s6 = scalar_select 0, %s5, %s3
  $region1: #{tpu_custom_call.1} parent=0
    #allocation4 [shape = 'u8[8192]{0}', space=vmem, size = 0x2000, scoped, tag = 'input window, operand 0']
    #allocation5 [shape = 's32[2]{0}', space=sflag, size = 0x8, scoped, tag = 'scoped memory for tpu_custom_call.1']
    #allocation6 [shape = 's32[2]{0}', space=sflag, size = 0x8, scoped, tag = 'scoped memory for tpu_custom_call.1']
    #allocation7 [shape = 'u8[8192]{0}', space=vmem, size = 0x2000, scoped, tag = 'input window, operand 1']
    #allocation8 [shape = 's32[2]{0}', space=sflag, size = 0x8, scoped, tag = 'scoped memory for tpu_custom_call.1']
    #allocation9 [shape = 'u8[8192]{0}', space=vmem, size = 0x2000, scoped, tag = 'output window, operand 0']
    %7 = vsyncpa [#allocation5], 0
    %s8 = scalar_lea.sflag [#allocation5], 1
    %9 = vsyncpa %s8, 0
    %10 = vsyncpa [#allocation8], 0
    %s11 = scalar_lea.sflag [#allocation8], 1
    %12 = vsyncpa %s11, 0
    %13 = vsyncpa [#allocation6], 0
    %s14 = scalar_lea.sflag [#allocation6], 1
    %15 = vsyncpa %s14, 0
    loop: start=0, step=1, limit=4
    $region2: #{tpu_custom_call.1} parent=1 // loop_pre_header
      _
    $region3: #{tpu_custom_call.1} parent=1 // loop_header
      %s17 = sphi 0, %s21
      %p18 = scmp.ge.s32.totalorder %s17, 4
      %s24 = sphi 0, %s36
      %s25 = sphi 0, %s32
      %s26 = sphi 0, %s24
      %s27 = sphi 0, %s25
      %s28 = sphi 0, %s26
      %s29 = sphi 0, %s27
      %s41 = sphi 0, %s43
      %s44 = sphi 0, %s41
      %s45 = sphi 0, %s44
      %s61 = sphi 0, %s45
      %s69 = sphi 0, %s71
      %s72 = sphi 0, %s69
      %s73 = sphi 0, %s72
      %s89 = sphi 0, %s73
      %s95 = sphi 0, %s97
      %s98 = sphi 0, %s95
      %s99 = sphi 0, %s98
      %s115 = sphi 0, %s99
    $region4: #{tpu_custom_call.1} parent=1 // loop_header_branch
      %20 = sbr.rel (%p18) target = $region8
    $region5: #{tpu_custom_call.1} parent=1 // loop_body
      %s22 = ssub.s32 %s17, 1
      %s23 = ssub.s32 %s17, 2
      %s30 = sadd.s32 1, %s25
      %p31 = scmp.ge.s32.totalorder %s30, 1
      %s32 = scalar_select %p31, 0, %s30
      %s33 = sadd.s32 1, %s24
      %s34 = scalar_select %p31, %s33, %s24
      %p35 = scmp.ge.s32.totalorder %s34, 2
      %s36 = scalar_select %p35, 0, %s34
      %s37 = sadd.s32 %s24, %s25
      %s38 = sadd.s32 %s36, %s32
      %s39 = ssub.s32 %s37, %s38
      %p40 = scmp.eq.s32.totalorder %s39, 0
      %s42 = sadd.s32 %s41, 1
      %s43 = scalar_select %p40, %s41, %s42
      %p46 = pneg %p40
      %p47 = scmp.eq.s32.totalorder %s17, 1
      %p48 = por %p46, %p47
      %p49 = scmp.ne.s32.totalorder %s41, %s44
      %p50 = scmp.eq.s32.totalorder %s17, 0
      %p51 = por %p49, %p50
      %p52 = scmp.ne.s32.totalorder %s41, %s44
      %p53 = scmp.eq.s32.totalorder %s22, 1
      %p54 = por %p52, %p53
      %p55 = scmp.ne.s32.totalorder %s44, %s45
      %p56 = scmp.eq.s32.totalorder %s22, 0
      %p57 = por %p55, %p56
      %p58 = scmp.ne.s32.totalorder %s44, %s45
      %p59 = scmp.eq.s32.totalorder %s23, 1
      %p60 = por %p58, %p59
      %p62 = scmp.ne.s32.totalorder %s45, %s61
      %p63 = scmp.eq.s32.totalorder %s23, 0
      %p64 = por %p62, %p63
      %s65 = sadd.s32 %s24, %s25
      %s66 = sadd.s32 %s36, %s32
      %s67 = ssub.s32 %s65, %s66
      %p68 = scmp.eq.s32.totalorder %s67, 0
      %s70 = sadd.s32 %s69, 1
      %s71 = scalar_select %p68, %s69, %s70
      %p74 = pneg %p68
      %p75 = scmp.eq.s32.totalorder %s17, 1
      %p76 = por %p74, %p75
      %p77 = scmp.ne.s32.totalorder %s69, %s72
      %p78 = scmp.eq.s32.totalorder %s17, 0
      %p79 = por %p77, %p78
      %p80 = scmp.ne.s32.totalorder %s69, %s72
      %p81 = scmp.eq.s32.totalorder %s22, 1
      %p82 = por %p80, %p81
      %p83 = scmp.ne.s32.totalorder %s72, %s73
      %p84 = scmp.eq.s32.totalorder %s22, 0
      %p85 = por %p83, %p84
      %p86 = scmp.ne.s32.totalorder %s72, %s73
      %p87 = scmp.eq.s32.totalorder %s23, 1
      %p88 = por %p86, %p87
      %p90 = scmp.ne.s32.totalorder %s73, %s89
      %p91 = scmp.eq.s32.totalorder %s23, 0
      %p92 = por %p90, %p91
      %s93 = ssub.s32 %s24, %s36
      %p94 = scmp.eq.s32.totalorder %s93, 0
      %s96 = sadd.s32 %s95, 1
      %s97 = scalar_select %p94, %s95, %s96
      %p100 = pneg %p94
      %p101 = scmp.eq.s32.totalorder %s17, 1
      %p102 = por %p100, %p101
      %p103 = scmp.ne.s32.totalorder %s95, %s98
      %p104 = scmp.eq.s32.totalorder %s17, 0
      %p105 = por %p103, %p104
      %p106 = scmp.ne.s32.totalorder %s95, %s98
      %p107 = scmp.eq.s32.totalorder %s22, 1
      %p108 = por %p106, %p107
      %p109 = scmp.ne.s32.totalorder %s98, %s99
      %p110 = scmp.eq.s32.totalorder %s22, 0
      %p111 = por %p109, %p110
      %p112 = scmp.ne.s32.totalorder %s98, %s99
      %p113 = scmp.eq.s32.totalorder %s23, 1
      %p114 = por %p112, %p113
      %p116 = scmp.ne.s32.totalorder %s99, %s115
      %p117 = scmp.eq.s32.totalorder %s23, 0
      %p118 = por %p116, %p117
      %p119 = scmp.le.s32.totalorder 1, %s17
      %p120 = scmp.lt.s32.totalorder %s17, 3
      %p121 = pnand %p119, %p120
      %p122 = pneg %p121
      // Predicated region
      $region9: #{tpu_custom_call.1} parent=5 // pred_check
        _
      $region10: #{tpu_custom_call.1} parent=5 // pred_check_branch
        %124 = sbr.rel (%p121) target = $region12
      $region11: #{tpu_custom_call.1} parent=5 // pred_region
        %s125 = ssub.s32 %s17, 1
      $region12: #{tpu_custom_call.1} parent=5 // pred_fallthru
        _
      %p126 = scmp.lt.s32.totalorder %s17, 2
      // Predicated region
      $region13: #{tpu_custom_call.1} parent=5 // pred_check
        %p127 = pneg %p126
      $region14: #{tpu_custom_call.1} parent=5 // pred_check_branch
        %129 = sbr.rel (%p127) target = $region16
      $region15: #{tpu_custom_call.1} parent=5 // pred_region
        // Predicated region
        $region17: #{tpu_custom_call.1} parent=15 // pred_check
          %p130 = pneg %p51
        $region18: #{tpu_custom_call.1} parent=15 // pred_check_branch
          %132 = sbr.rel (%p130) target = $region20
        $region19: #{tpu_custom_call.1} parent=15 // pred_region
          %s133 = sand.u32 %s41, 1
          %s134 = scalar_lea.sflag [#allocation5], %s133
          %s135 = sand.u32 %s41, 1
          %s136 = smul.addr %s135, 8
          %s137 = scalar_lea.vmem [#allocation4], %s136
          %s138 = sadd.s32 %s24, %s25
          %s140 = ssub.s32 128, 128
          %141 = vsyncadd %s134, %s140
          %s142 = smul.addr %s138, 128
          %s143 = scalar_lea.hbm %s0, %s142
          %s145 = sshll.u32 %s137, 4
          %s146 = int_to_ptr.vmem [resolvable:$true] %s145
          %148 = dma.hbm_to_vmem [thread:$0]  %s143, 128, %s146, %s134
        $region20: #{tpu_custom_call.1} parent=15 // pred_fallthru
          _
        // Predicated region
        $region21: #{tpu_custom_call.1} parent=15 // pred_check
          %p149 = pneg %p79
        $region22: #{tpu_custom_call.1} parent=15 // pred_check_branch
          %151 = sbr.rel (%p149) target = $region24
        $region23: #{tpu_custom_call.1} parent=15 // pred_region
          %s152 = sand.u32 %s69, 1
          %s153 = scalar_lea.sflag [#allocation8], %s152
          %s154 = sand.u32 %s69, 1
          %s155 = smul.addr %s154, 8
          %s156 = scalar_lea.vmem [#allocation7], %s155
          %s157 = sadd.s32 %s24, %s25
          %s159 = ssub.s32 128, 128
          %160 = vsyncadd %s153, %s159
          %s161 = smul.addr %s157, 128
          %s162 = scalar_lea.hbm %s1, %s161
          %s164 = sshll.u32 %s156, 4
          %s165 = int_to_ptr.vmem [resolvable:$true] %s164
          %167 = dma.hbm_to_vmem [thread:$0]  %s162, 128, %s165, %s153
        $region24: #{tpu_custom_call.1} parent=15 // pred_fallthru
          _
      $region16: #{tpu_custom_call.1} parent=5 // pred_fallthru
        _
      %p168 = scmp.le.s32.totalorder 1, %s17
      %p169 = scmp.lt.s32.totalorder %s17, 3
      %p170 = pnand %p168, %p169
      %p171 = pneg %p170
      // Predicated region
      $region25: #{tpu_custom_call.1} parent=5 // pred_check
        _
      $region26: #{tpu_custom_call.1} parent=5 // pred_check_branch
        %173 = sbr.rel (%p170) target = $region28
      $region27: #{tpu_custom_call.1} parent=5 // pred_region
        %s174 = ssub.s32 %s17, 1
        %s175 = sand.u32 %s44, 1
        %s176 = scalar_lea.sflag [#allocation5], %s175
        %s177 = sand.u32 %s44, 1
        %s178 = smul.addr %s177, 8
        %s179 = scalar_lea.vmem [#allocation4], %s178
        // Predicated region
        $region29: #{tpu_custom_call.1} parent=27 // pred_check
          %p180 = pneg %p57
        $region30: #{tpu_custom_call.1} parent=27 // pred_check_branch
          %182 = sbr.rel (%p180) target = $region32
        $region31: #{tpu_custom_call.1} parent=27 // pred_region
          %183 = dma.done %s176, 128
        $region32: #{tpu_custom_call.1} parent=27 // pred_fallthru
          _
        %s184 = sand.u32 %s72, 1
        %s185 = scalar_lea.sflag [#allocation8], %s184
        %s186 = sand.u32 %s72, 1
        %s187 = smul.addr %s186, 8
        %s188 = scalar_lea.vmem [#allocation7], %s187
        // Predicated region
        $region33: #{tpu_custom_call.1} parent=27 // pred_check
          %p189 = pneg %p85
        $region34: #{tpu_custom_call.1} parent=27 // pred_check_branch
          %191 = sbr.rel (%p189) target = $region36
        $region35: #{tpu_custom_call.1} parent=27 // pred_region
          %192 = dma.done %s185, 128
        $region36: #{tpu_custom_call.1} parent=27 // pred_fallthru
          _
        %s193 = sand.u32 %s44, 1
        %s194 = scalar_lea.sflag [#allocation5], %s193
        %s195 = sand.u32 %s44, 1
        %s196 = smul.addr %s195, 8
        %s197 = scalar_lea.vmem [#allocation4], %s196
        %p198 = pneg %p57
        %p199 = pneg %p54
        %s200 = sand.u32 %s72, 1
        %s201 = scalar_lea.sflag [#allocation8], %s200
        %s202 = sand.u32 %s72, 1
        %s203 = smul.addr %s202, 8
        %s204 = scalar_lea.vmem [#allocation7], %s203
        %p205 = pneg %p85
        %p206 = pneg %p82
        %p207 = pneg %p111
        %p208 = pneg %p108
        %s209 = sand.u32 %s98, 1
        %s210 = scalar_lea.sflag [#allocation6], %s209
        %s211 = sand.u32 %s98, 1
        %s212 = smul.addr %s211, 8
        %s213 = scalar_lea.vmem [#allocation9], %s212
        %s214 = sadd.s32 %s26, %s27
        %s215 = sadd.s32 %s26, %s27
        %p216 = scmp.eq.s32.totalorder %s27, 0
        // Predicated region
        $region37: #{tpu_custom_call.1} parent=27 // pred_check
          %p217 = pneg %p216
        $region38: #{tpu_custom_call.1} parent=27 // pred_check_branch
          %219 = sbr.rel (%p217) target = $region40
        $region39: #{tpu_custom_call.1} parent=27 // pred_region
          %220 = vst [vmem:[#allocation2] sm:$0xff] 0.0
          %221 = vst [vmem:[#allocation3] sm:$0xff] 0.0
        $region40: #{tpu_custom_call.1} parent=27 // pred_fallthru
          _
        %v222 = vld [vmem:[%s179] sm:$0xff]
        %v223 = vld [vmem:[%s188] sm:$0xff]
        %v224 = vsub.f32 %v222, %v223
        %v225 = vld [vmem:[#allocation2] sm:$0xff]
        %v226 = vmul.f32 %v224, %v224
        %v227 = vadd.f32 %v226, 0.0
        %v228 = vadd.f32 %v225, %v227
        %229 = vst [vmem:[#allocation2] sm:$0xff] %v228
        %v230 = vld [vmem:[#allocation3] sm:$0xff]
        %v231 = vand.u32 2147483647, %v224
        %v232 = vadd.f32 %v231, 0.0
        %v233 = vadd.f32 %v230, %v232
        %234 = vst [vmem:[#allocation3] sm:$0xff] %v233
        // Predicated region
        $region41: #{tpu_custom_call.1} parent=27 // pred_check
          %p235 = pneg %p216
        $region42: #{tpu_custom_call.1} parent=27 // pred_check_branch
          %237 = sbr.rel (%p235) target = $region44
        $region43: #{tpu_custom_call.1} parent=27 // pred_region
          %v238 = vld [vmem:[#allocation2] sm:$0xff]
          %v239 = vmul.f32 %v238, 0.7
          %v240 = vld [vmem:[#allocation3] sm:$0xff]
          %v241 = vmul.f32 %v240, 0.3
          %v242 = vadd.f32 %v239, %v241
          %v243 = vmul.f32 %v242, 0.00048828125
          %244 = vst [vmem:[%s213] sm:$0xff] %v243
        $region44: #{tpu_custom_call.1} parent=27 // pred_fallthru
          _
        %s245 = sand.u32 %s98, 1
        %s246 = scalar_lea.sflag [#allocation6], %s245
        %s247 = sand.u32 %s98, 1
        %s248 = smul.addr %s247, 8
        %s249 = scalar_lea.vmem [#allocation9], %s248
        // Predicated region
        $region45: #{tpu_custom_call.1} parent=27 // pred_check
          %p250 = pneg %p108
        $region46: #{tpu_custom_call.1} parent=27 // pred_check_branch
          %252 = sbr.rel (%p250) target = $region48
        $region47: #{tpu_custom_call.1} parent=27 // pred_region
          %s254 = ssub.s32 128, 128
          %255 = vsyncadd %s246, %s254
          %s256 = smul.addr %s26, 128
          %s257 = scalar_lea.hbm %s2, %s256
          %s259 = sshll.u32 %s249, 4
          %s260 = int_to_ptr.vmem [resolvable:$true] %s259
          %262 = dma.vmem_to_hbm [thread:$0]  %s260, 128, %s257, %s246
        $region48: #{tpu_custom_call.1} parent=27 // pred_fallthru
          _
      $region28: #{tpu_custom_call.1} parent=5 // pred_fallthru
        _
      %p263 = scmp.le.s32.totalorder 2, %s17
      // Predicated region
      $region49: #{tpu_custom_call.1} parent=5 // pred_check
        %p264 = pneg %p263
      $region50: #{tpu_custom_call.1} parent=5 // pred_check_branch
        %266 = sbr.rel (%p264) target = $region52
      $region51: #{tpu_custom_call.1} parent=5 // pred_region
        %s267 = ssub.s32 %s17, 2
        // Predicated region
        $region53: #{tpu_custom_call.1} parent=51 // pred_check
          %p268 = pneg %p114
        $region54: #{tpu_custom_call.1} parent=51 // pred_check_branch
          %270 = sbr.rel (%p268) target = $region56
        $region55: #{tpu_custom_call.1} parent=51 // pred_region
          %s271 = sand.u32 %s99, 1
          %s272 = scalar_lea.sflag [#allocation6], %s271
          %s273 = sand.u32 %s99, 1
          %s274 = smul.addr %s273, 8
          %s275 = scalar_lea.vmem [#allocation9], %s274
          %276 = dma.done %s272, 128
        $region56: #{tpu_custom_call.1} parent=51 // pred_fallthru
          _
      $region52: #{tpu_custom_call.1} parent=5 // pred_fallthru
        _
    $region6: #{tpu_custom_call.1} parent=1 // loop_footer
      %s21 = sadd.s32 1, %s17
    $region7: #{tpu_custom_call.1} parent=1 // loop_footer_branch
      %16 = sbr.rel target = $region3
    $region8: #{tpu_custom_call.1} parent=1 // loop_exit
      _
    %277 = vsyncpa [#allocation5], 1
    %s278 = scalar_lea.sflag [#allocation5], 1
    %279 = vsyncpa %s278, 1
    %280 = vsyncpa [#allocation8], 1
    %s281 = scalar_lea.sflag [#allocation8], 1
    %282 = vsyncpa %s281, 1
    %283 = vsyncpa [#allocation6], 1
    %s284 = scalar_lea.sflag [#allocation6], 1
    %285 = vsyncpa %s284, 1

</llo_original>
